<compile_context>
chip_gen: v7x
topology: tpu7x:2x2x1
jax: 0.10.0
libtpu: 0.0.40
codegen_flags: <defaults>
</compile_context>

<pallas_src>
import functools
import math

import jax
import jax.numpy as jnp
from jax.experimental import pallas as pl
from jax.experimental.pallas import tpu as pltpu

LANES = 128               # vreg lane width
SUBLANES = 8
TARGET_TILE_ROWS = 2048   # 2048 x 128 x 4B = 1 MiB per f32 input block


def _round_up(x, m):
    return ((x + m - 1) // m) * m


def _focal_terms(x, y, alpha, gamma):
    """Focal-loss math on f32 arrays. alpha/gamma are static Python floats."""
    # Numerically stable BCE with logits: max(x,0) - x*y + log(1 + exp(-|x|)).
    e = jnp.exp(-jnp.abs(x))                 # reused for BCE and sigmoid (1 EUP exp)
    log_term = jnp.log(1.0 + e)
    bce = jnp.maximum(x, 0.0) - x * y + log_term

    inv = 1.0 / (1.0 + e)                    # sigmoid(|x|)
    p = jnp.where(x >= 0.0, inv, 1.0 - inv)  # sigmoid(x), numerically stable

    p_t = y * p + (1.0 - y) * (1.0 - p)
    alpha_factor = y * alpha + (1.0 - y) * (1.0 - alpha)

    omp = jnp.maximum(1.0 - p_t, 0.0)
    if gamma == 1.5:
        modulating = omp * jnp.sqrt(omp)     # bit-closer to torch pow, 1 EUP sqrt
    elif gamma == 2.0:
        modulating = omp * omp
    elif gamma == 1.0:
        modulating = omp
    elif gamma == 0.0:
        modulating = jnp.ones_like(omp)
    else:
        modulating = jnp.where(
            omp > 0.0,
            jnp.exp(gamma * jnp.log(jnp.maximum(omp, 1e-38))),
            0.0,
        )
    return bce * alpha_factor * modulating


def _focal_elementwise_kernel(pred_ref, true_ref, out_ref, *, alpha, gamma):
    x = pred_ref[...].astype(jnp.float32)
    y = true_ref[...].astype(jnp.float32)
    out_ref[...] = _focal_terms(x, y, alpha, gamma).astype(out_ref.dtype)


def _focal_sum_kernel(pred_ref, true_ref, out_ref, *, alpha, gamma,
                      n_valid, need_mask, tile_rows):
    @pl.when(pl.program_id(0) == 0)
    def _():
        out_ref[...] = jnp.zeros_like(out_ref)

    x = pred_ref[...].astype(jnp.float32)
    y = true_ref[...].astype(jnp.float32)
    loss = _focal_terms(x, y, alpha, gamma)

    if need_mask:
        # Zero out padded / out-of-bounds elements so they don't pollute the sum.
        row0 = pl.program_id(0) * tile_rows
        row_ids = jax.lax.broadcasted_iota(jnp.int32, loss.shape, 0) + row0
        col_ids = jax.lax.broadcasted_iota(jnp.int32, loss.shape, 1)
        lin = row_ids * LANES + col_ids
        loss = jnp.where(lin < n_valid, loss, 0.0)

    part = jnp.sum(loss, axis=1, keepdims=True)
    part = jnp.sum(part, axis=0, keepdims=True)
    out_ref[...] += part


def most_discriminant_feature_loss(pred, true, reduction=None, alpha=0.25, gamma=1.5):
    """Focal loss via Pallas. reduction in {None, 'mean', 'sum'}."""
    assert pred.shape == true.shape
    orig_shape = pred.shape
    n = math.prod(orig_shape) if orig_shape else 1
    out_dtype = jnp.promote_types(pred.dtype, true.dtype)
    alpha = float(alpha)
    gamma = float(gamma)

    # Lane-dense 2D layout (rows, 128). Pad only if the element count is not
    # lane-aligned (rare); otherwise a pure reshape (no extra HBM pass).
    rows = -(-n // LANES)
    flat_pad = rows * LANES - n
    pred_f = pred.reshape(-1)
    true_f = true.reshape(-1)
    if flat_pad:
        pred_f = jnp.pad(pred_f, (0, flat_pad))
        true_f = jnp.pad(true_f, (0, flat_pad))
    pred2 = pred_f.reshape(rows, LANES)
    true2 = true_f.reshape(rows, LANES)

    tile_rows = min(TARGET_TILE_ROWS, _round_up(rows, SUBLANES))
    num_blocks = -(-rows // tile_rows)
    grid = (num_blocks,)

    in_specs = [
        pl.BlockSpec((tile_rows, LANES), lambda i: (i, 0)),
        pl.BlockSpec((tile_rows, LANES), lambda i: (i, 0)),
    ]
    bytes_in = (pred2.dtype.itemsize + true2.dtype.itemsize) * n

    if reduction in ("mean", "sum"):
        need_mask = (num_blocks * tile_rows * LANES) > n
        kernel = functools.partial(
            _focal_sum_kernel, alpha=alpha, gamma=gamma,
            n_valid=n, need_mask=need_mask, tile_rows=tile_rows)
        total = pl.pallas_call(
            kernel,
            out_shape=jax.ShapeDtypeStruct((1, 1), jnp.float32),
            grid_spec=pltpu.PrefetchScalarGridSpec(
                num_scalar_prefetch=0,
                grid=grid,
                in_specs=in_specs,
                out_specs=pl.BlockSpec((1, 1), lambda i: (0, 0)),
            ),
            compiler_params=pltpu.CompilerParams(
                dimension_semantics=("arbitrary",)),
            cost_estimate=pl.CostEstimate(
                flops=20 * n, transcendentals=4 * n, bytes_accessed=bytes_in + 4),
        )(pred2, true2)[0, 0]
        if reduction == "mean":
            total = total / jnp.float32(n)
        return total.astype(out_dtype)

    kernel = functools.partial(_focal_elementwise_kernel, alpha=alpha, gamma=gamma)
    loss2 = pl.pallas_call(
        kernel,
        out_shape=jax.ShapeDtypeStruct((rows, LANES), out_dtype),
        grid_spec=pltpu.PrefetchScalarGridSpec(
            num_scalar_prefetch=0,
            grid=grid,
            in_specs=in_specs,
            out_specs=pl.BlockSpec((tile_rows, LANES), lambda i: (i, 0)),
        ),
        compiler_params=pltpu.CompilerParams(
            dimension_semantics=("parallel",)),
        cost_estimate=pl.CostEstimate(
            flops=20 * n, transcendentals=4 * n,
            bytes_accessed=bytes_in + jnp.dtype(out_dtype).itemsize * n),
    )(pred2, true2)

    loss_flat = loss2.reshape(-1)
    if flat_pad:
        loss_flat = loss_flat[:n]
    return loss_flat.reshape(orig_shape)


if __name__ == "__main__":
    key = jax.random.PRNGKey(0)
    k1, k2 = jax.random.split(key)

    # NCHW-like shapes consistent with a per-pixel classification loss.
    B, C, H, W = 2, 4, 16, 16
    pred = jax.random.normal(k1, (B, C, H, W), dtype=jnp.float32)            # logits
    true = (jax.random.uniform(k2, (B, C, H, W)) > 0.5).astype(jnp.float32)  # binary targets

    loss = jax.block_until_ready(most_discriminant_feature_loss(pred, true, reduction=None))

    # Pure-JAX reference of the same math (alpha=0.25, gamma=1.5).
    p = jax.nn.sigmoid(pred)
    bce = jnp.maximum(pred, 0.0) - pred * true + jnp.log1p(jnp.exp(-jnp.abs(pred)))
    p_t = true * p + (1 - true) * (1 - p)
    ref = bce * (true * 0.25 + (1 - true) * 0.75) * (1.0 - p_t) ** 1.5

    assert loss.shape == (B, C, H, W)
    assert jnp.max(jnp.abs(loss - ref)) < 1e-5

    # Fused reduction variants.
    loss_sum = jax.block_until_ready(most_discriminant_feature_loss(pred, true, reduction="sum"))
    loss_mean = jax.block_until_ready(most_discriminant_feature_loss(pred, true, reduction="mean"))
    assert jnp.allclose(loss_sum, ref.sum(), rtol=1e-4, atol=1e-4)
    assert jnp.allclose(loss_mean, ref.mean(), rtol=1e-4, atol=1e-5)

    print("KERNEL_OK")
</pallas_src>

<mosaic_0001>
module attributes {stable_mosaic.version = 11 : i64} {
  func.func @_focal_elementwise_kernel(%arg0: i32, %arg1: memref<16x128xf32, #tpu.memory_space<vmem>>, %arg2: memref<16x128xf32, #tpu.memory_space<vmem>>, %arg3: memref<16x128xf32, #tpu.memory_space<vmem>>) attributes {dimension_semantics = [#tpu.dimension_semantics<parallel>], iteration_bounds = array<i64: 1>, scalar_prefetch = 0 : i64, scratch_operands = 0 : i64, tpu.core_type = #tpu.core_type<tc>, window_params = [{transform_indices = @transform_0, window_bounds = array<i64: 16, 128>}, {transform_indices = @transform_1, window_bounds = array<i64: 16, 128>}, {transform_indices = @transform_2, window_bounds = array<i64: 16, 128>}]} {
    %c0 = arith.constant 0 : index
    %c0_0 = arith.constant 0 : index
    %0 = vector.load %arg1[%c0, %c0_0] : memref<16x128xf32, #tpu.memory_space<vmem>>, vector<16x128xf32>
    %c0_1 = arith.constant 0 : index
    %c0_2 = arith.constant 0 : index
    %1 = vector.load %arg2[%c0_1, %c0_2] : memref<16x128xf32, #tpu.memory_space<vmem>>, vector<16x128xf32>
    %2 = math.absf %0 : vector<16x128xf32>
    %cst = arith.constant 0.000000e+00 : f32
    %3 = vector.broadcast %cst : f32 to vector<16x128xf32>
    %4 = arith.subf %3, %2 : vector<16x128xf32>
    %5 = math.exp %4 : vector<16x128xf32>
    %cst_3 = arith.constant 1.000000e+00 : f32
    %6 = vector.broadcast %cst_3 : f32 to vector<16x128xf32>
    %7 = arith.addf %6, %5 : vector<16x128xf32>
    %8 = math.log %7 : vector<16x128xf32>
    %cst_4 = arith.constant 0.000000e+00 : f32
    %9 = vector.broadcast %cst_4 : f32 to vector<16x128xf32>
    %10 = arith.maximumf %0, %9 : vector<16x128xf32>
    %11 = arith.mulf %0, %1 : vector<16x128xf32>
    %12 = arith.subf %10, %11 : vector<16x128xf32>
    %13 = arith.addf %12, %8 : vector<16x128xf32>
    %cst_5 = arith.constant 1.000000e+00 : f32
    %14 = vector.broadcast %cst_5 : f32 to vector<16x128xf32>
    %15 = arith.addf %14, %5 : vector<16x128xf32>
    %cst_6 = arith.constant 1.000000e+00 : f32
    %16 = vector.broadcast %cst_6 : f32 to vector<16x128xf32>
    %17 = arith.divf %16, %15 : vector<16x128xf32>
    %cst_7 = arith.constant 0.000000e+00 : f32
    %18 = vector.broadcast %cst_7 : f32 to vector<16x128xf32>
    %19 = arith.cmpf oge, %0, %18 : vector<16x128xf32>
    %cst_8 = arith.constant 1.000000e+00 : f32
    %20 = vector.broadcast %cst_8 : f32 to vector<16x128xf32>
    %21 = arith.subf %20, %17 : vector<16x128xf32>
    %22 = arith.select %19, %17, %21 : vector<16x128xi1>, vector<16x128xf32>
    %23 = arith.mulf %1, %22 : vector<16x128xf32>
    %cst_9 = arith.constant 1.000000e+00 : f32
    %24 = vector.broadcast %cst_9 : f32 to vector<16x128xf32>
    %25 = arith.subf %24, %1 : vector<16x128xf32>
    %cst_10 = arith.constant 1.000000e+00 : f32
    %26 = vector.broadcast %cst_10 : f32 to vector<16x128xf32>
    %27 = arith.subf %26, %22 : vector<16x128xf32>
    %28 = arith.mulf %25, %27 : vector<16x128xf32>
    %29 = arith.addf %23, %28 : vector<16x128xf32>
    %cst_11 = arith.constant 2.500000e-01 : f32
    %30 = vector.broadcast %cst_11 : f32 to vector<16x128xf32>
    %31 = arith.mulf %1, %30 : vector<16x128xf32>
    %cst_12 = arith.constant 1.000000e+00 : f32
    %32 = vector.broadcast %cst_12 : f32 to vector<16x128xf32>
    %33 = arith.subf %32, %1 : vector<16x128xf32>
    %cst_13 = arith.constant 7.500000e-01 : f32
    %34 = vector.broadcast %cst_13 : f32 to vector<16x128xf32>
    %35 = arith.mulf %33, %34 : vector<16x128xf32>
    %36 = arith.addf %31, %35 : vector<16x128xf32>
    %cst_14 = arith.constant 1.000000e+00 : f32
    %37 = vector.broadcast %cst_14 : f32 to vector<16x128xf32>
    %38 = arith.subf %37, %29 : vector<16x128xf32>
    %cst_15 = arith.constant 0.000000e+00 : f32
    %39 = vector.broadcast %cst_15 : f32 to vector<16x128xf32>
    %40 = arith.maximumf %38, %39 : vector<16x128xf32>
    %41 = math.sqrt %40 : vector<16x128xf32>
    %42 = arith.mulf %40, %41 : vector<16x128xf32>
    %43 = arith.mulf %13, %36 : vector<16x128xf32>
    %44 = arith.mulf %43, %42 : vector<16x128xf32>
    %c0_16 = arith.constant 0 : index
    %c0_17 = arith.constant 0 : index
    %45 = vector.load %arg3[%c0_16, %c0_17] : memref<16x128xf32, #tpu.memory_space<vmem>>, vector<16x128xf32>
    tpu.vector_store %arg3[%c0_16, %c0_17], %44 {strides = array<i32>} : memref<16x128xf32, #tpu.memory_space<vmem>>, vector<16x128xf32>,
    return
  }
  func.func @transform_0(%arg0: i32) -> (i32, i32) {
    %c0_i32 = arith.constant 0 : i32
    %c0_i32_0 = arith.constant 0 : i32
    return %arg0, %c0_i32 : i32, i32
  }
  func.func @transform_1(%arg0: i32) -> (i32, i32) {
    %c0_i32 = arith.constant 0 : i32
    %c0_i32_0 = arith.constant 0 : i32
    return %arg0, %c0_i32 : i32, i32
  }
  func.func @transform_2(%arg0: i32) -> (i32, i32) {
    %c0_i32 = arith.constant 0 : i32
    %c0_i32_0 = arith.constant 0 : i32
    return %arg0, %c0_i32 : i32, i32
  }
}

</mosaic_0001>

<llo_original>
// kernel: tpu_custom_call.1
$region0: #{tpu_custom_call.1}
  #allocation0 [shape = 'u32[]', space=smem, size = 0x4, offset = 0x4, fixed_abs, tag = 'smem constant byte address 0x4 - core index']
  #allocation1 [shape = 'u32[144,128]{1,0:T(1,128)}', space=vmem, size = 0x12000, scoped, tag = 'internal scratch']
  %s0 = inlined_call_operand.hbm [shape: f32[16,128], index: 0, kind: input, shape index: {}]
  %s1 = inlined_call_operand.hbm [shape: f32[16,128], index: 1, kind: input, shape index: {}]
  %s2 = inlined_call_operand.hbm [shape: f32[16,128], index: 2, kind: output, shape index: {}]
  %s3 = sld [smem:[#allocation0]]
  $region26: #{tpu_custom_call.1} parent=0
    _
  %s5 = ssub.s32 1, %s3
  %s6 = scalar_select 0, %s5, %s3
  $region1: #{tpu_custom_call.1} parent=0
    #allocation2 [shape = 'u8[8192]{0}', space=vmem, size = 0x2000, scoped, tag = 'input window, operand 0, single buffered']
    #allocation3 [shape = 's32[1]{0}', space=sflag, size = 0x4, scoped, tag = 'scoped memory for tpu_custom_call.1']
    #allocation4 [shape = 's32[1]{0}', space=sflag, size = 0x4, scoped, tag = 'scoped memory for tpu_custom_call.1']
    #allocation5 [shape = 'u8[8192]{0}', space=vmem, size = 0x2000, scoped, tag = 'input window, operand 1, single buffered']
    #allocation6 [shape = 's32[1]{0}', space=sflag, size = 0x4, scoped, tag = 'scoped memory for tpu_custom_call.1']
    #allocation7 [shape = 'u8[8192]{0}', space=vmem, size = 0x2000, scoped, tag = 'output window, operand 0, single buffered']
    %7 = vsyncpa [#allocation3], 0
    %8 = vsyncpa [#allocation6], 0
    %9 = vsyncpa [#allocation4], 0
    // Predicated region
    $region2: #{tpu_custom_call.1} parent=1 // pred_check
      _
    $region3: #{tpu_custom_call.1} parent=1 // pred_check_branch
      %11 = sbr.rel (0) target = $region5
    $region4: #{tpu_custom_call.1} parent=1 // pred_region
      %s13 = ssub.s32 256, 256
      %14 = vsyncadd [#allocation3], %s13
      %s15 = sshll.u32 [#allocation2], 4
      %s16 = int_to_ptr.vmem [resolvable:$true] %s15
      %21 = dma.hbm_to_vmem [thread:$0]  %s0, 256, %s16, [#allocation3], 128, 128, 8
    $region5: #{tpu_custom_call.1} parent=1 // pred_fallthru
      _
    // Predicated region
    $region6: #{tpu_custom_call.1} parent=1 // pred_check
      _
    $region7: #{tpu_custom_call.1} parent=1 // pred_check_branch
      %23 = sbr.rel (0) target = $region9
    $region8: #{tpu_custom_call.1} parent=1 // pred_region
      %s25 = ssub.s32 256, 256
      %26 = vsyncadd [#allocation6], %s25
      %s27 = sshll.u32 [#allocation5], 4
      %s28 = int_to_ptr.vmem [resolvable:$true] %s27
      %33 = dma.hbm_to_vmem [thread:$0]  %s1, 256, %s28, [#allocation6], 128, 128, 8
    $region9: #{tpu_custom_call.1} parent=1 // pred_fallthru
      _
    // Predicated region
    $region10: #{tpu_custom_call.1} parent=1 // pred_check
      _
    $region11: #{tpu_custom_call.1} parent=1 // pred_check_branch
      %35 = sbr.rel (0) target = $region13
    $region12: #{tpu_custom_call.1} parent=1 // pred_region
      %36 = dma.done [#allocation3], 256
    $region13: #{tpu_custom_call.1} parent=1 // pred_fallthru
      _
    // Predicated region
    $region14: #{tpu_custom_call.1} parent=1 // pred_check
      _
    $region15: #{tpu_custom_call.1} parent=1 // pred_check_branch
      %38 = sbr.rel (0) target = $region17
    $region16: #{tpu_custom_call.1} parent=1 // pred_region
      %39 = dma.done [#allocation6], 256
    $region17: #{tpu_custom_call.1} parent=1 // pred_fallthru
      _
    %v40 = vld [vmem:[#allocation2] sm:$0xff]
    %v41 = vld [vmem:[#allocation2 + $0x8] sm:$0xff]
    %v42 = vld [vmem:[#allocation5] sm:$0xff]
    %v43 = vld [vmem:[#allocation5 + $0x8] sm:$0xff]
    %v44 = vand.u32 2147483647, %v40
    %v45 = vand.u32 2147483647, %v41
    %v46 = vsub.f32 0.0, %v44
    %v47 = vsub.f32 0.0, %v45
    %v48 = vmul.f32 %v46, 1.442695
    %v49 = vpow.pop %v48
    %v50 = vmul.f32 %v47, 1.442695
    %v51 = vpow.pop %v50
    %v52 = vadd.f32 %v49, 1.0
    %v53 = vadd.f32 %v51, 1.0
    %v54 = vlog2.pop %v52
    %v55 = vmul.f32 %v54, 0.6931472
    %v56 = vlog2.pop %v53
    %v57 = vmul.f32 %v56, 0.6931472
    %v58 = vmax.f32 %v40, 0.0
    %v59 = vmax.f32 %v41, 0.0
    %v60 = vmul.f32 %v40, %v42
    %v61 = vmul.f32 %v41, %v43
    %v62 = vsub.f32 %v58, %v60
    %v63 = vsub.f32 %v59, %v61
    %v64 = vadd.f32 %v62, %v55
    %v65 = vadd.f32 %v63, %v57
    %v66 = vrcp.pop %v52
    %v67 = vmul.f32 1.0, %v66
    %v68 = vrcp.pop %v53
    %v69 = vmul.f32 1.0, %v68
    %vm70 = vcmp.ge.f32.partialorder %v40, 0.0
    %vm71 = vcmp.ge.f32.partialorder %v41, 0.0
    %v72 = vsub.f32 1.0, %v67
    %v73 = vsub.f32 1.0, %v69
    %v74 = vsel %vm70, %v67, %v72
    %v75 = vsel %vm71, %v69, %v73
    %v76 = vmul.f32 %v42, %v74
    %v77 = vmul.f32 %v43, %v75
    %v78 = vsub.f32 1.0, %v42
    %v79 = vsub.f32 1.0, %v43
    %v80 = vsub.f32 1.0, %v74
    %v81 = vsub.f32 1.0, %v75
    %v82 = vmul.f32 %v78, %v80
    %v83 = vmul.f32 %v79, %v81
    %v84 = vadd.f32 %v76, %v82
    %v85 = vadd.f32 %v77, %v83
    %v86 = vmul.f32 %v42, 0.25
    %v87 = vmul.f32 %v43, 0.25
    %v88 = vmul.f32 %v78, 0.75
    %v89 = vmul.f32 %v79, 0.75
    %v90 = vadd.f32 %v86, %v88
    %v91 = vadd.f32 %v87, %v89
    %v92 = vsub.f32 1.0, %v84
    %v93 = vsub.f32 1.0, %v85
    %v94 = vmax.f32 %v92, 0.0
    %v95 = vmax.f32 %v93, 0.0
    %v96 = vrsqrt.pop %v94
    %v97 = vmul.f32 %v94, %v96
    %vm98 = vcmp.eq.f32.partialorder %v94, inf
    %v99 = vsel %vm98, %v94, %v97
    %vm100 = vcmp.eq.f32.partialorder %v94, 0.0
    %v101 = vand.u32 %v94, 2147483648
    %v102 = vsel %vm100, %v101, %v99
    %v103 = vrsqrt.pop %v95
    %v104 = vmul.f32 %v95, %v103
    %vm105 = vcmp.eq.f32.partialorder %v95, inf
    %v106 = vsel %vm105, %v95, %v104
    %vm107 = vcmp.eq.f32.partialorder %v95, 0.0
    %v108 = vand.u32 %v95, 2147483648
    %v109 = vsel %vm107, %v108, %v106
    %v110 = vmul.f32 %v94, %v102
    %v111 = vmul.f32 %v95, %v109
    %v112 = vmul.f32 %v64, %v90
    %v113 = vmul.f32 %v65, %v91
    %v114 = vmul.f32 %v112, %v110
    %v115 = vmul.f32 %v113, %v111
    %116 = vst [vmem:[#allocation7] sm:$0xff] %v114
    %117 = vst [vmem:[#allocation7 + $0x8] sm:$0xff] %v115
    // Predicated region
    $region18: #{tpu_custom_call.1} parent=1 // pred_check
      _
    $region19: #{tpu_custom_call.1} parent=1 // pred_check_branch
      %119 = sbr.rel (0) target = $region21
    $region20: #{tpu_custom_call.1} parent=1 // pred_region
      %s121 = ssub.s32 256, 256
      %122 = vsyncadd [#allocation4], %s121
      %s123 = sshll.u32 [#allocation7], 4
      %s124 = int_to_ptr.vmem [resolvable:$true] %s123
      %129 = dma.vmem_to_hbm [thread:$0]  %s124, 256, %s2, [#allocation4], 128, 128, 8
    $region21: #{tpu_custom_call.1} parent=1 // pred_fallthru
      _
    // Predicated region
    $region22: #{tpu_custom_call.1} parent=1 // pred_check
      _
    $region23: #{tpu_custom_call.1} parent=1 // pred_check_branch
      %131 = sbr.rel (0) target = $region25
    $region24: #{tpu_custom_call.1} parent=1 // pred_region
      %132 = dma.done [#allocation4], 256
    $region25: #{tpu_custom_call.1} parent=1 // pred_fallthru
      _
    %133 = vsyncpa [#allocation3], 1
    %134 = vsyncpa [#allocation6], 1
    %135 = vsyncpa [#allocation4], 1

</llo_original>
